<compile_context>
chip_gen: v7x
topology: tpu7x:2x2x1
jax: 0.10.0
libtpu: 0.0.40
codegen_flags: <defaults>
</compile_context>

<pallas_src>
import jax
import jax.numpy as jnp
from jax.experimental import pallas as pl
from jax.experimental.pallas import tpu as pltpu


def _round_up(x, m):
    return ((x + m - 1) // m) * m


def _emb_kernel(tok_ref, w_ref, tree_ref, out_ref):
    # tok_ref : (TM, 1)    int32   token ids for this row-tile
    # w_ref   : (V, D)     float32 full embedding table (VMEM resident)
    # tree_ref: (TM, T)    float32 structural features for this row-tile
    # out_ref : (TM, D+T)  float32
    tok = tok_ref[...]                                    # (TM, 1)
    tm = tok.shape[0]
    V, D = w_ref.shape

    # Embedding lookup as a one-hot matmul on the MXU (gather-free, exact).
    # TODO(synk): for large vocab sizes switch to a true gather (jnp.take on a
    # VMEM-resident table or a scalar-prefetched row-gather BlockSpec); the
    # one-hot path scales O(N*V*D) and needs the whole table in VMEM.
    lane_ids = jax.lax.broadcasted_iota(jnp.int32, (tm, V), 1)
    onehot = (tok == lane_ids).astype(w_ref.dtype)        # (TM, V)
    x = jnp.dot(onehot, w_ref[...], preferred_element_type=jnp.float32)  # (TM, D)

    # Two direct stores instead of a concatenate (no extra (TM, D+T) copy).
    out_ref[:, :D] = x.astype(out_ref.dtype)
    out_ref[:, D:] = (tree_ref[...].astype(jnp.float32) * jnp.float32(0.1)).astype(
        out_ref.dtype
    )


def _make_emb_call(n_pad, tm, V, D, T, *, single_buffer_table):
    if single_buffer_table:
        # Constant index_map -> no need to double buffer the weight block.
        table_spec = pl.BlockSpec(
            (V, D), lambda i: (0, 0), pipeline_mode=pl.Buffered(1)
        )
    else:
        table_spec = pl.BlockSpec((V, D), lambda i: (0, 0))

    return pl.pallas_call(
        _emb_kernel,
        out_shape=jax.ShapeDtypeStruct((n_pad, D + T), jnp.float32),
        grid_spec=pltpu.PrefetchScalarGridSpec(
            num_scalar_prefetch=0,
            grid=(n_pad // tm,),
            in_specs=[
                pl.BlockSpec((tm, 1), lambda i: (i, 0)),   # token ids
                table_spec,                                 # full emb table
                pl.BlockSpec((tm, T), lambda i: (i, 0)),   # tree features
            ],
            out_specs=pl.BlockSpec((tm, D + T), lambda i: (i, 0)),
        ),
        compiler_params=pltpu.CompilerParams(
            dimension_semantics=("parallel",),          # shards rows across TCs on v7x
            vmem_limit_bytes=32 * 1024 * 1024,          # explicit; safe on v5e/v6e/v7x
        ),
    )


def emb_forward(tokens, emb_weight, tree, *, row_tile=1024):
    """tokens: (B, S) int; emb_weight: (V, D) f32; tree: (B, S, T) f32
    returns: (B, S, D + T) f32  ==  concat([emb[tokens], 0.1 * tree], axis=2)"""
    B, S = tokens.shape
    V, D = emb_weight.shape
    T = tree.shape[-1]
    N = B * S

    # Largest row tile that makes sense: multiple of 8, at most row_tile, and
    # no bigger than the (8-rounded) problem size. Pad N up to a tile multiple.
    tm = _round_up(min(row_tile, _round_up(N, 8)), 8)
    n_pad = _round_up(N, tm)

    tok_flat = tokens.reshape(N, 1).astype(jnp.int32)
    tree_flat = tree.reshape(N, T).astype(jnp.float32)
    w = emb_weight.astype(jnp.float32)
    if n_pad != N:
        pad = n_pad - N
        tok_flat = jnp.pad(tok_flat, ((0, pad), (0, 0)))   # pad id 0 (valid row, sliced off)
        tree_flat = jnp.pad(tree_flat, ((0, pad), (0, 0)))

    try:
        out_flat = _make_emb_call(n_pad, tm, V, D, T, single_buffer_table=True)(
            tok_flat, w, tree_flat
        )
        out_flat = jax.block_until_ready(out_flat)
    except Exception:
        # Fallback for JAX versions where pipeline_mode=pl.Buffered(1) is not
        # accepted on a pallas_call BlockSpec. The table is tiny here, so the
        # default double-buffering costs only 2 * V * D * 4 bytes of VMEM.
        out_flat = _make_emb_call(n_pad, tm, V, D, T, single_buffer_table=False)(
            tok_flat, w, tree_flat
        )

    if n_pad != N:
        out_flat = out_flat[:N]
    return out_flat.reshape(B, S, D + T)


def kaiming_normal(key, shape, fan_in):
    # Matches torch.nn.init.kaiming_normal_ default (fan_in, gain=sqrt(2)).
    std = (2.0 / fan_in) ** 0.5
    return jax.random.normal(key, shape, dtype=jnp.float32) * std


if __name__ == "__main__":
    # Small shapes consistent with the module:
    #   args.vocab_size=32, args.nFeats (in_dim)=32, batch=2, seq=8,
    #   tree structural-feature dim=16, use_tree=True.
    B, S = 2, 8
    vocab_size = 32
    in_dim = 32
    tree_dim = 16

    key = jax.random.PRNGKey(0)
    k_emb, k_tok, k_tree = jax.random.split(key, 3)

    # Parameters (thm_emb is built in __init__ but never used in forward).
    emb_weight = kaiming_normal(k_emb, (vocab_size, in_dim), fan_in=in_dim)

    # Inputs
    tokens = jax.random.randint(k_tok, (B, S), 0, vocab_size, dtype=jnp.int32)
    tree = jax.random.normal(k_tree, (B, S, tree_dim), dtype=jnp.float32)

    out = jax.block_until_ready(emb_forward(tokens, emb_weight, tree))
    ref = jnp.concatenate(
        [jnp.take(emb_weight, tokens, axis=0), tree * 0.1], axis=2
    )
    assert out.shape == (B, S, in_dim + tree_dim)
    assert jnp.allclose(out, ref, atol=1e-5, rtol=1e-5)

    # Second check: larger N exercises the big-row-tile + row-padding path.
    B2, S2 = 3, 70
    k_tok2, k_tree2 = jax.random.split(jax.random.PRNGKey(1), 2)
    tokens2 = jax.random.randint(k_tok2, (B2, S2), 0, vocab_size, dtype=jnp.int32)
    tree2 = jax.random.normal(k_tree2, (B2, S2, tree_dim), dtype=jnp.float32)
    out2 = jax.block_until_ready(emb_forward(tokens2, emb_weight, tree2))
    ref2 = jnp.concatenate(
        [jnp.take(emb_weight, tokens2, axis=0), tree2 * 0.1], axis=2
    )
    assert jnp.allclose(out2, ref2, atol=1e-5, rtol=1e-5)

    print("KERNEL_OK")
</pallas_src>

<mosaic_0001>
module attributes {stable_mosaic.version = 11 : i64} {
  func.func @_emb_kernel(%arg0: i32, %arg1: memref<16x1xi32, #tpu.memory_space<vmem>>, %arg2: memref<32x32xf32, #tpu.memory_space<vmem>>, %arg3: memref<16x16xf32, #tpu.memory_space<vmem>>, %arg4: memref<16x48xf32, #tpu.memory_space<vmem>>) attributes {dimension_semantics = [#tpu.dimension_semantics<parallel>], iteration_bounds = array<i64: 1>, scalar_prefetch = 0 : i64, scratch_operands = 0 : i64, tpu.core_type = #tpu.core_type<tc>, window_params = [{transform_indices = @transform_0, window_bounds = array<i64: 16, 1>}, {pipeline_mode = #tpu.pipeline_mode<synchronous>, transform_indices = @transform_1, window_bounds = array<i64: 32, 32>}, {transform_indices = @transform_2, window_bounds = array<i64: 16, 16>}, {transform_indices = @transform_3, window_bounds = array<i64: 16, 48>}]} {
    %c0 = arith.constant 0 : index
    %c0_0 = arith.constant 0 : index
    %0 = vector.load %arg1[%c0, %c0_0] : memref<16x1xi32, #tpu.memory_space<vmem>>, vector<16x1xi32>
    %1 = tpu.iota {dimensions = array<i32: 1>} : vector<16x32xi32>
    %2 = vector.broadcast %0 : vector<16x1xi32> to vector<16x32xi32>
    %3 = arith.cmpi eq, %2, %1 : vector<16x32xi32>
    %4 = arith.extui %3 : vector<16x32xi1> to vector<16x32xi32>
    %5 = arith.sitofp %4 : vector<16x32xi32> to vector<16x32xf32>
    %c0_1 = arith.constant 0 : index
    %c0_2 = arith.constant 0 : index
    %6 = vector.load %arg2[%c0_1, %c0_2] : memref<32x32xf32, #tpu.memory_space<vmem>>, vector<32x32xf32>
    %cst = arith.constant dense<0.000000e+00> : vector<16x32xf32>
    %7 = tpu.matmul %5, %6, %cst {dimension_numbers = #tpu.dot_dimension_numbers<[1], [0], [0], [1], [0, 0, 1, 1], [], []>} : vector<16x32xf32>, vector<32x32xf32>, vector<16x32xf32> -> vector<16x32xf32>
    %c0_3 = arith.constant 0 : index
    %c0_4 = arith.constant 0 : index
    %8 = vector.load %arg4[%c0_3, %c0_4] : memref<16x48xf32, #tpu.memory_space<vmem>>, vector<16x32xf32>
    tpu.vector_store %arg4[%c0_3, %c0_4], %7 {strides = array<i32>} : memref<16x48xf32, #tpu.memory_space<vmem>>, vector<16x32xf32>,
    %c0_5 = arith.constant 0 : index
    %c0_6 = arith.constant 0 : index
    %9 = vector.load %arg3[%c0_5, %c0_6] : memref<16x16xf32, #tpu.memory_space<vmem>>, vector<16x16xf32>
    %cst_7 = arith.constant 1.000000e-01 : f32
    %10 = vector.broadcast %cst_7 : f32 to vector<16x16xf32>
    %11 = arith.mulf %9, %10 : vector<16x16xf32>
    %c0_8 = arith.constant 0 : index
    %c32 = arith.constant 32 : index
    %12 = vector.load %arg4[%c0_8, %c32] : memref<16x48xf32, #tpu.memory_space<vmem>>, vector<16x16xf32>
    tpu.vector_store %arg4[%c0_8, %c32], %11 {strides = array<i32>} : memref<16x48xf32, #tpu.memory_space<vmem>>, vector<16x16xf32>,
    return
  }
  func.func @transform_0(%arg0: i32) -> (i32, i32) {
    %c0_i32 = arith.constant 0 : i32
    %c0_i32_0 = arith.constant 0 : i32
    return %arg0, %c0_i32 : i32, i32
  }
  func.func @transform_1(%arg0: i32) -> (i32, i32) {
    %c0_i32 = arith.constant 0 : i32
    %c0_i32_0 = arith.constant 0 : i32
    %c0_i32_1 = arith.constant 0 : i32
    return %c0_i32, %c0_i32_0 : i32, i32
  }
  func.func @transform_2(%arg0: i32) -> (i32, i32) {
    %c0_i32 = arith.constant 0 : i32
    %c0_i32_0 = arith.constant 0 : i32
    return %arg0, %c0_i32 : i32, i32
  }
  func.func @transform_3(%arg0: i32) -> (i32, i32) {
    %c0_i32 = arith.constant 0 : i32
    %c0_i32_0 = arith.constant 0 : i32
    return %arg0, %c0_i32 : i32, i32
  }
}

module attributes {stable_mosaic.version = 11 : i64} {
  func.func @_emb_kernel(%arg0: i32, %arg1: memref<16x1xi32, #tpu.memory_space<vmem>>, %arg2: memref<32x32xf32, #tpu.memory_space<vmem>>, %arg3: memref<16x16xf32, #tpu.memory_space<vmem>>, %arg4: memref<16x48xf32, #tpu.memory_space<vmem>>) attributes {dimension_semantics = [#tpu.dimension_semantics<parallel>], iteration_bounds = array<i64: 1>, scalar_prefetch = 0 : i64, scratch_operands = 0 : i64, tpu.core_type = #tpu.core_type<tc>, window_params = [{transform_indices = @transform_0, window_bounds = array<i64: 16, 1>}, {pipeline_mode = #tpu.pipeline_mode<synchronous>, transform_indices = @transform_1, window_bounds = array<i64: 32, 32>}, {transform_indices = @transform_2, window_bounds = array<i64: 16, 16>}, {transform_indices = @transform_3, window_bounds = array<i64: 16, 48>}]} {
    %c0 = arith.constant 0 : index
    %c0_0 = arith.constant 0 : index
    %0 = vector.load %arg1[%c0, %c0_0] : memref<16x1xi32, #tpu.memory_space<vmem>>, vector<16x1xi32>
    %1 = tpu.iota {dimensions = array<i32: 1>} : vector<16x32xi32>
    %2 = vector.broadcast %0 : vector<16x1xi32> to vector<16x32xi32>
    %3 = arith.cmpi eq, %2, %1 : vector<16x32xi32>
    %4 = arith.extui %3 : vector<16x32xi1> to vector<16x32xi32>
    %5 = arith.sitofp %4 : vector<16x32xi32> to vector<16x32xf32>
    %c0_1 = arith.constant 0 : index
    %c0_2 = arith.constant 0 : index
    %6 = vector.load %arg2[%c0_1, %c0_2] : memref<32x32xf32, #tpu.memory_space<vmem>>, vector<32x32xf32>
    %cst = arith.constant dense<0.000000e+00> : vector<16x32xf32>
    %7 = tpu.matmul %5, %6, %cst {dimension_numbers = #tpu.dot_dimension_numbers<[1], [0], [0], [1], [0, 0, 1, 1], [], []>} : vector<16x32xf32>, vector<32x32xf32>, vector<16x32xf32> -> vector<16x32xf32>
    %c0_3 = arith.constant 0 : index
    %c0_4 = arith.constant 0 : index
    %8 = vector.load %arg4[%c0_3, %c0_4] : memref<16x48xf32, #tpu.memory_space<vmem>>, vector<16x32xf32>
    tpu.vector_store %arg4[%c0_3, %c0_4], %7 {strides = array<i32>} : memref<16x48xf32, #tpu.memory_space<vmem>>, vector<16x32xf32>,
    %c0_5 = arith.constant 0 : index
    %c0_6 = arith.constant 0 : index
    %9 = vector.load %arg3[%c0_5, %c0_6] : memref<16x16xf32, #tpu.memory_space<vmem>>, vector<16x16xf32>
    %cst_7 = arith.constant 1.000000e-01 : f32
    %10 = vector.broadcast %cst_7 : f32 to vector<16x16xf32>
    %11 = arith.mulf %9, %10 : vector<16x16xf32>
    %c0_8 = arith.constant 0 : index
    %c32 = arith.constant 32 : index
    %12 = vector.load %arg4[%c0_8, %c32] : memref<16x48xf32, #tpu.memory_space<vmem>>, vector<16x16xf32>
    tpu.vector_store %arg4[%c0_8, %c32], %11 {strides = array<i32>} : memref<16x48xf32, #tpu.memory_space<vmem>>, vector<16x16xf32>,
    return
  }
  func.func @transform_0(%arg0: i32) -> (i32, i32) {
    %c0_i32 = arith.constant 0 : i32
    %c0_i32_0 = arith.constant 0 : i32
    return %arg0, %c0_i32 : i32, i32
  }
  func.func @transform_1(%arg0: i32) -> (i32, i32) {
    %c0_i32 = arith.constant 0 : i32
    %c0_i32_0 = arith.constant 0 : i32
    %c0_i32_1 = arith.constant 0 : i32
    return %c0_i32, %c0_i32_0 : i32, i32
  }
  func.func @transform_2(%arg0: i32) -> (i32, i32) {
    %c0_i32 = arith.constant 0 : i32
    %c0_i32_0 = arith.constant 0 : i32
    return %arg0, %c0_i32 : i32, i32
  }
  func.func @transform_3(%arg0: i32) -> (i32, i32) {
    %c0_i32 = arith.constant 0 : i32
    %c0_i32_0 = arith.constant 0 : i32
    return %arg0, %c0_i32 : i32, i32
  }
}

</mosaic_0001>

<llo_original>
// kernel: tpu_custom_call.1
$region0: #{tpu_custom_call.1}
  #allocation0 [shape = 'u32[]', space=smem, size = 0x4, offset = 0x4, fixed_abs, tag = 'smem constant byte address 0x4 - core index']
  #allocation1 [shape = 'u32[144,128]{1,0:T(1,128)}', space=vmem, size = 0x12000, scoped, tag = 'internal scratch']
  %s0 = inlined_call_operand.vmem [shape: s32[16,1], index: 0, kind: input, shape index: {}]
  %s1 = inlined_call_operand.hbm [shape: f32[32,32], index: 1, kind: input, shape index: {}]
  %s2 = inlined_call_operand.vmem [shape: f32[16,16], index: 2, kind: input, shape index: {}]
  %s3 = inlined_call_operand.hbm [shape: f32[16,48], index: 3, kind: output, shape index: {}]
  %s4 = sld [smem:[#allocation0]]
  $region26: #{tpu_custom_call.1} parent=0
    _
  %s6 = ssub.s32 1, %s4
  %s7 = scalar_select 0, %s6, %s4
  $region1: #{tpu_custom_call.1} parent=0
    #allocation2 [shape = 'u8[16384]{0}', space=vmem, size = 0x4000, scoped, tag = 'input window, operand 1, single buffered']
    #allocation3 [shape = 's32[1]{0}', space=sflag, size = 0x4, scoped, tag = 'scoped memory for tpu_custom_call.1']
    #allocation4 [shape = 's32[1]{0}', space=sflag, size = 0x4, scoped, tag = 'scoped memory for tpu_custom_call.1']
    #allocation5 [shape = 'u8[8192]{0}', space=vmem, size = 0x2000, scoped, tag = 'output window, operand 0, single buffered']
    %8 = vsyncpa [#allocation3], 0
    %9 = vsyncpa [#allocation4], 0
    // Predicated region
    $region2: #{tpu_custom_call.1} parent=1 // pred_check
      _
    $region3: #{tpu_custom_call.1} parent=1 // pred_check_branch
      %11 = sbr.rel (0) target = $region5
    $region4: #{tpu_custom_call.1} parent=1 // pred_region
      _
    $region5: #{tpu_custom_call.1} parent=1 // pred_fallthru
      _
    // Predicated region
    $region6: #{tpu_custom_call.1} parent=1 // pred_check
      _
    $region7: #{tpu_custom_call.1} parent=1 // pred_check_branch
      %13 = sbr.rel (0) target = $region9
    $region8: #{tpu_custom_call.1} parent=1 // pred_region
      %s15 = ssub.s32 512, 512
      %16 = vsyncadd [#allocation3], %s15
      %s17 = sshll.u32 [#allocation2], 4
      %s18 = int_to_ptr.vmem [resolvable:$true] %s17
      %23 = dma.hbm_to_vmem [thread:$0]  %s1, 512, %s18, [#allocation3], 128, 128, 8
    $region9: #{tpu_custom_call.1} parent=1 // pred_fallthru
      _
    // Predicated region
    $region10: #{tpu_custom_call.1} parent=1 // pred_check
      _
    $region11: #{tpu_custom_call.1} parent=1 // pred_check_branch
      %25 = sbr.rel (0) target = $region13
    $region12: #{tpu_custom_call.1} parent=1 // pred_region
      _
    $region13: #{tpu_custom_call.1} parent=1 // pred_fallthru
      _
    // Predicated region
    $region14: #{tpu_custom_call.1} parent=1 // pred_check
      _
    $region15: #{tpu_custom_call.1} parent=1 // pred_check_branch
      %27 = sbr.rel (0) target = $region17
    $region16: #{tpu_custom_call.1} parent=1 // pred_region
      %28 = dma.done [#allocation3], 512
    $region17: #{tpu_custom_call.1} parent=1 // pred_fallthru
      _
    %v29 = vld [vmem:[%s0] sm:$0xff]
    %v30 = vld [vmem:[%s0 + $0x8] sm:$0xff]
    %v31 = vlaneseq
    %v32 = vand.u32 %v31, 127
    %33 = vset.pattern.permute.xlu0 0
    %34 = vperm.xlu0 %33, %v29
    %v35 = vpop.permute.xlu0 %34
    %36 = vset.pattern.permute.xlu0 0
    %37 = vperm.xlu0 %36, %v30
    %v38 = vpop.permute.xlu0 %37
    %vm39 = vcmp.eq.s32.totalorder %v35, %v32
    %vm40 = vcmp.eq.s32.totalorder %v38, %v32
    %v41 = vsel %vm39, 1, 0
    %v42 = vsel %vm40, 1, 0
    %v43 = vcvt.s32.f32 %v41
    %v44 = vcvt.s32.f32 %v42
    %v45 = vld [vmem:[#allocation2] sm:$0xff]
    %v46 = vld [vmem:[#allocation2 + $0x8] sm:$0xff]
    %v47 = vld [vmem:[#allocation2 + $0x10] sm:$0xff]
    %v48 = vld [vmem:[#allocation2 + $0x18] sm:$0xff]
    %vm49 = vcmask 261120
    %v51 = vsel %vm49, %v43, 0
    %v54 = vsel %vm49, %v44, 0
    %56 = vmatprep.subr.mxu0 0.0
    %57 = vmatpush1.msra.mxu0 %v45
    %58 = vmatprep.subr.mxu0 0.0
    %59 = vmatpush1.msra.mxu0 %v46
    %60 = vmatprep.subr.mxu0 0.0
    %61 = vmatpush1.msra.mxu0 %v47
    %62 = vmatprep.subr.mxu0 0.0
    %63 = vmatpush1.msra.mxu0 %v48
    %64 = vmatprep.subr.mxu0 0.0
    %65 = vmatpush1.msra.mxu0 0.0
    %66 = vmatprep.subr.mxu0 0.0
    %67 = vmatpush1.msra.mxu0 0.0
    %68 = vmatprep.subr.mxu0 0.0
    %69 = vmatpush1.msra.mxu0 0.0
    %70 = vmatprep.subr.mxu0 0.0
    %71 = vmatpush1.msra.mxu0 0.0
    %72 = vmatprep.subr.mxu0 0.0
    %73 = vmatpush1.msra.mxu0 0.0
    %74 = vmatprep.subr.mxu0 0.0
    %75 = vmatpush1.msra.mxu0 0.0
    %76 = vmatprep.subr.mxu0 0.0
    %77 = vmatpush1.msra.mxu0 0.0
    %78 = vmatprep.subr.mxu0 0.0
    %79 = vmatpush1.msra.mxu0 0.0
    %80 = vmatprep.subr.mxu0 0.0
    %81 = vmatpush1.msra.mxu0 0.0
    %82 = vmatprep.subr.mxu0 0.0
    %83 = vmatpush1.msra.mxu0 0.0
    %84 = vmatprep.subr.mxu0 0.0
    %85 = vmatpush1.msra.mxu0 0.0
    %86 = vmatprep.subr.mxu0 0.0
    %87 = vmatpush1.msra.mxu0 0.0
    %88 = vmatprep.subr.mxu0 0.0
    %89 = vmatpush1.msra.mxu0 0.0
    %90 = vmatprep.subr.mxu0 0.0
    %91 = vmatpush1.msra.mxu0 0.0
    %92 = vmatprep.subr.mxu0 0.0
    %93 = vmatpush1.msra.mxu0 0.0
    %94 = vmatprep.subr.mxu0 0.0
    %95 = vmatpush1.msra.mxu0 0.0
    %96 = vmatprep.subr.mxu0 0.0
    %97 = vmatpush1.msra.mxu0 0.0
    %98 = vmatprep.subr.mxu0 0.0
    %99 = vmatpush1.msra.mxu0 0.0
    %100 = vmatprep.subr.mxu0 0.0
    %101 = vmatpush1.msra.mxu0 0.0
    %102 = vmatprep.subr.mxu0 0.0
    %103 = vmatpush1.msra.mxu0 0.0
    %104 = vmatprep.subr.mxu0 0.0
    %105 = vmatpush1.msra.mxu0 0.0
    %106 = vmatprep.subr.mxu0 0.0
    %107 = vmatpush1.msra.mxu0 0.0
    %108 = vmatprep.subr.mxu0 0.0
    %109 = vmatpush1.msra.mxu0 0.0
    %110 = vmatprep.subr.mxu0 0.0
    %111 = vmatpush1.msra.mxu0 0.0
    %112 = vmatprep.subr.mxu0 0.0
    %113 = vmatpush1.msra.mxu0 0.0
    %114 = vmatprep.subr.mxu0 0.0
    %115 = vmatpush1.msra.mxu0 0.0
    %116 = vmatprep.subr.mxu0 0.0
    %117 = vmatpush1.msra.mxu0 0.0
    %118 = vmatprep.subr.mxu0 0.0
    %119 = vmatpush1.msra.mxu0 0.0
    %120 = vmatprep.mubr.f32.mxu0 0.0
    %121 = vmatmul.mubr.f32.gmra.mrb[0].mxu0 %v51
    %v122 = vpop.f32.mrb[0].mxu0
    %v123 = vadd.f32 0.0, %v122
    %v124 = vpop.f32.mrb[0].mxu0
    %125 = vmatprep.mubr.f32.mxu0 0.0
    %126 = vmatmul.mubr.f32.gmra.mrb[0].mxu0 %v54
    %v127 = vpop.f32.mrb[0].mxu0
    %v128 = vadd.f32 0.0, %v127
    %v129 = vpop.f32.mrb[0].mxu0
    %130 = vdwg.mxu0
    %131 = vst.msk [vmem:[#allocation5] sm:$0xff] %vm49, %v123
    %132 = vst.msk [vmem:[#allocation5 + $0x8] sm:$0xff] %vm49, %v128
    %v133 = vld [vmem:[%s2] sm:$0xff]
    %v134 = vld [vmem:[%s2 + $0x8] sm:$0xff]
    %v135 = vmul.f32 %v133, 0.1
    %v136 = vmul.f32 %v134, 0.1
    %139 = vrot.lane.b32.xlu0 %v135, 32
    %v140 = vpop.permute.xlu0 %139
    %141 = vrot.lane.b32.xlu0 %v136, 32
    %v142 = vpop.permute.xlu0 %141
    %vm145 = vcmask 392448
    %146 = vst.msk [vmem:[#allocation5] sm:$0xff] %vm145, %v140
    %147 = vst.msk [vmem:[#allocation5 + $0x8] sm:$0xff] %vm145, %v142
    // Predicated region
    $region18: #{tpu_custom_call.1} parent=1 // pred_check
      _
    $region19: #{tpu_custom_call.1} parent=1 // pred_check_branch
      %149 = sbr.rel (0) target = $region21
    $region20: #{tpu_custom_call.1} parent=1 // pred_region
      %s151 = ssub.s32 256, 256
      %152 = vsyncadd [#allocation4], %s151
      %s153 = sshll.u32 [#allocation5], 4
      %s154 = int_to_ptr.vmem [resolvable:$true] %s153
      %159 = dma.vmem_to_hbm [thread:$0]  %s154, 256, %s3, [#allocation4], 128, 128, 8
    $region21: #{tpu_custom_call.1} parent=1 // pred_fallthru
      _
    // Predicated region
    $region22: #{tpu_custom_call.1} parent=1 // pred_check
      _
    $region23: #{tpu_custom_call.1} parent=1 // pred_check_branch
      %161 = sbr.rel (0) target = $region25
    $region24: #{tpu_custom_call.1} parent=1 // pred_region
      %162 = dma.done [#allocation4], 256
    $region25: #{tpu_custom_call.1} parent=1 // pred_fallthru
      _
    %163 = vsyncpa [#allocation3], 1
    %164 = vsyncpa [#allocation4], 1

// kernel: tpu_custom_call.1
$region0: #{tpu_custom_call.1}
  #allocation0 [shape = 'u32[]', space=smem, size = 0x4, offset = 0x4, fixed_abs, tag = 'smem constant byte address 0x4 - core index']
  #allocation1 [shape = 'u32[144,128]{1,0:T(1,128)}', space=vmem, size = 0x12000, scoped, tag = 'internal scratch']
  %s0 = inlined_call_operand.vmem [shape: s32[16,1], index: 0, kind: input, shape index: {}]
  %s1 = inlined_call_operand.hbm [shape: f32[32,32], index: 1, kind: input, shape index: {}]
  %s2 = inlined_call_operand.vmem [shape: f32[16,16], index: 2, kind: input, shape index: {}]
  %s3 = inlined_call_operand.hbm [shape: f32[16,48], index: 3, kind: output, shape index: {}]
  %s4 = sld [smem:[#allocation0]]
  $region26: #{tpu_custom_call.1} parent=0
    _
  %s6 = ssub.s32 1, %s4
  %s7 = scalar_select 0, %s6, %s4
  $region1: #{tpu_custom_call.1} parent=0
    #allocation2 [shape = 'u8[16384]{0}', space=vmem, size = 0x4000, scoped, tag = 'input window, operand 1, single buffered']
    #allocation3 [shape = 's32[1]{0}', space=sflag, size = 0x4, scoped, tag = 'scoped memory for tpu_custom_call.1']
    #allocation4 [shape = 's32[1]{0}', space=sflag, size = 0x4, scoped, tag = 'scoped memory for tpu_custom_call.1']
    #allocation5 [shape = 'u8[8192]{0}', space=vmem, size = 0x2000, scoped, tag = 'output window, operand 0, single buffered']
    %8 = vsyncpa [#allocation3], 0
    %9 = vsyncpa [#allocation4], 0
    // Predicated region
    $region2: #{tpu_custom_call.1} parent=1 // pred_check
      _
    $region3: #{tpu_custom_call.1} parent=1 // pred_check_branch
      %11 = sbr.rel (0) target = $region5
    $region4: #{tpu_custom_call.1} parent=1 // pred_region
      _
    $region5: #{tpu_custom_call.1} parent=1 // pred_fallthru
      _
    // Predicated region
    $region6: #{tpu_custom_call.1} parent=1 // pred_check
      _
    $region7: #{tpu_custom_call.1} parent=1 // pred_check_branch
      %13 = sbr.rel (0) target = $region9
    $region8: #{tpu_custom_call.1} parent=1 // pred_region
      %s15 = ssub.s32 512, 512
      %16 = vsyncadd [#allocation3], %s15
      %s17 = sshll.u32 [#allocation2], 4
      %s18 = int_to_ptr.vmem [resolvable:$true] %s17
      %23 = dma.hbm_to_vmem [thread:$0]  %s1, 512, %s18, [#allocation3], 128, 128, 8
    $region9: #{tpu_custom_call.1} parent=1 // pred_fallthru
      _
    // Predicated region
    $region10: #{tpu_custom_call.1} parent=1 // pred_check
      _
    $region11: #{tpu_custom_call.1} parent=1 // pred_check_branch
      %25 = sbr.rel (0) target = $region13
    $region12: #{tpu_custom_call.1} parent=1 // pred_region
      _
    $region13: #{tpu_custom_call.1} parent=1 // pred_fallthru
      _
    // Predicated region
    $region14: #{tpu_custom_call.1} parent=1 // pred_check
      _
    $region15: #{tpu_custom_call.1} parent=1 // pred_check_branch
      %27 = sbr.rel (0) target = $region17
    $region16: #{tpu_custom_call.1} parent=1 // pred_region
      %28 = dma.done [#allocation3], 512
    $region17: #{tpu_custom_call.1} parent=1 // pred_fallthru
      _
    %v29 = vld [vmem:[%s0] sm:$0xff]
    %v30 = vld [vmem:[%s0 + $0x8] sm:$0xff]
    %v31 = vlaneseq
    %v32 = vand.u32 %v31, 127
    %33 = vset.pattern.permute.xlu0 0
    %34 = vperm.xlu0 %33, %v29
    %v35 = vpop.permute.xlu0 %34
    %36 = vset.pattern.permute.xlu0 0
    %37 = vperm.xlu0 %36, %v30
    %v38 = vpop.permute.xlu0 %37
    %vm39 = vcmp.eq.s32.totalorder %v35, %v32
    %vm40 = vcmp.eq.s32.totalorder %v38, %v32
    %v41 = vsel %vm39, 1, 0
    %v42 = vsel %vm40, 1, 0
    %v43 = vcvt.s32.f32 %v41
    %v44 = vcvt.s32.f32 %v42
    %v45 = vld [vmem:[#allocation2] sm:$0xff]
    %v46 = vld [vmem:[#allocation2 + $0x8] sm:$0xff]
    %v47 = vld [vmem:[#allocation2 + $0x10] sm:$0xff]
    %v48 = vld [vmem:[#allocation2 + $0x18] sm:$0xff]
    %vm49 = vcmask 261120
    %v51 = vsel %vm49, %v43, 0
    %v54 = vsel %vm49, %v44, 0
    %56 = vmatprep.subr.mxu0 0.0
    %57 = vmatpush1.msra.mxu0 %v45
    %58 = vmatprep.subr.mxu0 0.0
    %59 = vmatpush1.msra.mxu0 %v46
    %60 = vmatprep.subr.mxu0 0.0
    %61 = vmatpush1.msra.mxu0 %v47
    %62 = vmatprep.subr.mxu0 0.0
    %63 = vmatpush1.msra.mxu0 %v48
    %64 = vmatprep.subr.mxu0 0.0
    %65 = vmatpush1.msra.mxu0 0.0
    %66 = vmatprep.subr.mxu0 0.0
    %67 = vmatpush1.msra.mxu0 0.0
    %68 = vmatprep.subr.mxu0 0.0
    %69 = vmatpush1.msra.mxu0 0.0
    %70 = vmatprep.subr.mxu0 0.0
    %71 = vmatpush1.msra.mxu0 0.0
    %72 = vmatprep.subr.mxu0 0.0
    %73 = vmatpush1.msra.mxu0 0.0
    %74 = vmatprep.subr.mxu0 0.0
    %75 = vmatpush1.msra.mxu0 0.0
    %76 = vmatprep.subr.mxu0 0.0
    %77 = vmatpush1.msra.mxu0 0.0
    %78 = vmatprep.subr.mxu0 0.0
    %79 = vmatpush1.msra.mxu0 0.0
    %80 = vmatprep.subr.mxu0 0.0
    %81 = vmatpush1.msra.mxu0 0.0
    %82 = vmatprep.subr.mxu0 0.0
    %83 = vmatpush1.msra.mxu0 0.0
    %84 = vmatprep.subr.mxu0 0.0
    %85 = vmatpush1.msra.mxu0 0.0
    %86 = vmatprep.subr.mxu0 0.0
    %87 = vmatpush1.msra.mxu0 0.0
    %88 = vmatprep.subr.mxu0 0.0
    %89 = vmatpush1.msra.mxu0 0.0
    %90 = vmatprep.subr.mxu0 0.0
    %91 = vmatpush1.msra.mxu0 0.0
    %92 = vmatprep.subr.mxu0 0.0
    %93 = vmatpush1.msra.mxu0 0.0
    %94 = vmatprep.subr.mxu0 0.0
    %95 = vmatpush1.msra.mxu0 0.0
    %96 = vmatprep.subr.mxu0 0.0
    %97 = vmatpush1.msra.mxu0 0.0
    %98 = vmatprep.subr.mxu0 0.0
    %99 = vmatpush1.msra.mxu0 0.0
    %100 = vmatprep.subr.mxu0 0.0
    %101 = vmatpush1.msra.mxu0 0.0
    %102 = vmatprep.subr.mxu0 0.0
    %103 = vmatpush1.msra.mxu0 0.0
    %104 = vmatprep.subr.mxu0 0.0
    %105 = vmatpush1.msra.mxu0 0.0
    %106 = vmatprep.subr.mxu0 0.0
    %107 = vmatpush1.msra.mxu0 0.0
    %108 = vmatprep.subr.mxu0 0.0
    %109 = vmatpush1.msra.mxu0 0.0
    %110 = vmatprep.subr.mxu0 0.0
    %111 = vmatpush1.msra.mxu0 0.0
    %112 = vmatprep.subr.mxu0 0.0
    %113 = vmatpush1.msra.mxu0 0.0
    %114 = vmatprep.subr.mxu0 0.0
    %115 = vmatpush1.msra.mxu0 0.0
    %116 = vmatprep.subr.mxu0 0.0
    %117 = vmatpush1.msra.mxu0 0.0
    %118 = vmatprep.subr.mxu0 0.0
    %119 = vmatpush1.msra.mxu0 0.0
    %120 = vmatprep.mubr.f32.mxu0 0.0
    %121 = vmatmul.mubr.f32.gmra.mrb[0].mxu0 %v51
    %v122 = vpop.f32.mrb[0].mxu0
    %v123 = vadd.f32 0.0, %v122
    %v124 = vpop.f32.mrb[0].mxu0
    %125 = vmatprep.mubr.f32.mxu0 0.0
    %126 = vmatmul.mubr.f32.gmra.mrb[0].mxu0 %v54
    %v127 = vpop.f32.mrb[0].mxu0
    %v128 = vadd.f32 0.0, %v127
    %v129 = vpop.f32.mrb[0].mxu0
    %130 = vdwg.mxu0
    %131 = vst.msk [vmem:[#allocation5] sm:$0xff] %vm49, %v123
    %132 = vst.msk [vmem:[#allocation5 + $0x8] sm:$0xff] %vm49, %v128
    %v133 = vld [vmem:[%s2] sm:$0xff]
    %v134 = vld [vmem:[%s2 + $0x8] sm:$0xff]
    %v135 = vmul.f32 %v133, 0.1
    %v136 = vmul.f32 %v134, 0.1
    %139 = vrot.lane.b32.xlu0 %v135, 32
    %v140 = vpop.permute.xlu0 %139
    %141 = vrot.lane.b32.xlu0 %v136, 32
    %v142 = vpop.permute.xlu0 %141
    %vm145 = vcmask 392448
    %146 = vst.msk [vmem:[#allocation5] sm:$0xff] %vm145, %v140
    %147 = vst.msk [vmem:[#allocation5 + $0x8] sm:$0xff] %vm145, %v142
    // Predicated region
    $region18: #{tpu_custom_call.1} parent=1 // pred_check
      _
    $region19: #{tpu_custom_call.1} parent=1 // pred_check_branch
      %149 = sbr.rel (0) target = $region21
    $region20: #{tpu_custom_call.1} parent=1 // pred_region
      %s151 = ssub.s32 256, 256
      %152 = vsyncadd [#allocation4], %s151
      %s153 = sshll.u32 [#allocation5], 4
      %s154 = int_to_ptr.vmem [resolvable:$true] %s153
      %159 = dma.vmem_to_hbm [thread:$0]  %s154, 256, %s3, [#allocation4], 128, 128, 8
    $region21: #{tpu_custom_call.1} parent=1 // pred_fallthru
      _
    // Predicated region
    $region22: #{tpu_custom_call.1} parent=1 // pred_check
      _
    $region23: #{tpu_custom_call.1} parent=1 // pred_check_branch
      %161 = sbr.rel (0) target = $region25
    $region24: #{tpu_custom_call.1} parent=1 // pred_region
      %162 = dma.done [#allocation4], 256
    $region25: #{tpu_custom_call.1} parent=1 // pred_fallthru
      _
    %163 = vsyncpa [#allocation3], 1
    %164 = vsyncpa [#allocation4], 1

</llo_original>
